<compile_context>
chip_gen: v6e
topology: v6e:2x2x1
jax: 0.10.0
libtpu: 0.0.40
codegen_flags: <defaults>
</compile_context>

<pallas_src>
import math

import jax
import jax.numpy as jnp
from jax.experimental import pallas as pl
from jax.experimental.pallas import tpu as pltpu


# ------------------------------ Pallas kernel -------------------------------

def dynamic_residual_kernel(x_ref, r_ref, w_ref, o_ref):
    # w_ref is the raw (pre-sigmoid) parameter, shape (1, GC); broadcast over rows.
    w = w_ref[...].astype(jnp.float32)
    gate_f32 = 1.0 / (1.0 + jnp.exp(-w))              # sigmoid on the EUP, f32

    # bf16 inputs: do the mix in bf16 (native VPU on v6e/v7x); else f32.
    compute_dtype = jnp.bfloat16 if x_ref.dtype == jnp.bfloat16 else jnp.float32
    gate = gate_f32.astype(compute_dtype)
    x = x_ref[...].astype(compute_dtype)
    r = r_ref[...].astype(compute_dtype)
    o_ref[...] = (gate * x + (1.0 - gate) * r).astype(o_ref.dtype)


# ------------------------------ wrapper (JAX) --------------------------------

_LANE_TARGET = 2048          # max folded lane width
_TILE_BYTES_TARGET = 6 << 20  # ~6 MiB per input tile -> ~18 MiB moved per step
_VMEM_LIMIT_BYTES = 48 << 20  # 3 streams x 2 buffers x 6 MiB + slack; fits v7x 64 MiB


def _round_up(x: int, m: int) -> int:
    return ((x + m - 1) // m) * m


def _choose_group(M: int, C: int, lane_target: int = _LANE_TARGET) -> int:
    """Fold G rows (G | M) into the lane axis so the last dim is lane-dense."""
    if C >= 128:
        return 1
    gmax = min(M, max(1, lane_target // C))
    divisors = [g for g in range(1, gmax + 1) if M % g == 0]
    # Prefer the smallest G giving a multiple-of-128 lane width (unmasked vst).
    for g in divisors:
        if (g * C) % 128 == 0:
            return g
    # Else the smallest G reaching >= 128 lanes.
    for g in divisors:
        if g * C >= 128:
            return g
    # Tiny M*C: take the widest divisor available (stores may be masked).
    return divisors[-1] if divisors else 1


def _choose_row_tile(MG: int, GC: int, itemsize: int,
                     tile_bytes_target: int = _TILE_BYTES_TARGET) -> int:
    """Row-tile size: ~tile_bytes_target per input tile, multiple of 8 rows
    (or the full extent), and >= 2 grid steps when there is enough work so
    the parallel axis can shard across v7x's two TensorCores."""
    if MG <= 8:
        return MG
    tm = (tile_bytes_target // max(1, GC * itemsize)) // 8 * 8
    tm = max(8, tm)
    tm = min(tm, MG)
    if tm >= MG:
        if MG >= 16:
            tm = min(MG, _round_up((MG + 1) // 2, 8))   # >= 2 steps (v7x megacore)
        else:
            tm = MG
    return tm


def dynamic_residual_forward(x, residual, weight):
    """x, residual: [..., C]; weight: [1, C] (raw parameter; sigmoid in-kernel)."""
    assert x.shape == residual.shape
    C = x.shape[-1]
    assert weight.shape == (1, C)

    orig_shape = x.shape
    M = math.prod(orig_shape[:-1])
    itemsize = jnp.dtype(x.dtype).itemsize

    G = _choose_group(M, C)                 # fold G rows into the lane axis
    MG, GC = M // G, G * C
    TM = _choose_row_tile(MG, GC, itemsize)
    num_steps = -(-MG // TM)                # ceil-div grid; partial last block OK

    x2 = x.reshape(MG, GC)
    r2 = residual.reshape(MG, GC)
    w2 = jnp.tile(weight, (1, G))           # (1, G*C), raw (pre-sigmoid) parameter

    out = pl.pallas_call(
        dynamic_residual_kernel,
        out_shape=jax.ShapeDtypeStruct((MG, GC), x.dtype),
        grid_spec=pltpu.PrefetchScalarGridSpec(
            num_scalar_prefetch=0,
            grid=(num_steps,),
            in_specs=[
                pl.BlockSpec((TM, GC), lambda i: (i, 0)),   # x row-tile
                pl.BlockSpec((TM, GC), lambda i: (i, 0)),   # residual row-tile
                pl.BlockSpec((1, GC), lambda i: (0, 0)),    # gate param, VMEM-resident
            ],
            out_specs=pl.BlockSpec((TM, GC), lambda i: (i, 0)),
        ),
        compiler_params=pltpu.CompilerParams(
            dimension_semantics=("parallel",),
            vmem_limit_bytes=_VMEM_LIMIT_BYTES,
        ),
    )(x2, r2, w2)

    return out.reshape(orig_shape)


# ------------------------- reference (pure JAX) ------------------------------

def dynamic_residual_reference(x, residual, weight):
    gate = 1.0 / (1.0 + jnp.exp(-weight.astype(jnp.float32)))   # (1, C)
    return gate * x.astype(jnp.float32) + (1.0 - gate) * residual.astype(jnp.float32)


# ---------------------------------- main -------------------------------------

if __name__ == "__main__":
    key = jax.random.PRNGKey(0)
    k_x, k_r, k_w = jax.random.split(key, 3)

    # Primary test shape (channels-last, as the module implies).
    B, N, C = 2, 16, 32
    x = jax.random.normal(k_x, (B, N, C), dtype=jnp.float32)
    residual = jax.random.normal(k_r, (B, N, C), dtype=jnp.float32)
    # Module init is torch.ones(1, channels); perturb so the gate is non-uniform.
    weight = 1.0 + 0.5 * jax.random.normal(k_w, (1, C), dtype=jnp.float32)

    out = dynamic_residual_forward(x, residual, weight)
    out = jax.block_until_ready(out)
    ref = dynamic_residual_reference(x, residual, weight)
    assert out.shape == (B, N, C)
    assert jnp.allclose(out, ref, atol=1e-6, rtol=1e-6), "f32 mismatch vs reference"

    # Awkward shape: non-power-of-two fold + ceil-div grid with a partial block.
    B2, N2, C2 = 2, 1001, 32
    x2 = jax.random.normal(k_x, (B2, N2, C2), dtype=jnp.float32)
    r2 = jax.random.normal(k_r, (B2, N2, C2), dtype=jnp.float32)
    w2 = 1.0 + 0.5 * jax.random.normal(k_w, (1, C2), dtype=jnp.float32)
    out2 = jax.block_until_ready(dynamic_residual_forward(x2, r2, w2))
    ref2 = dynamic_residual_reference(x2, r2, w2)
    assert jnp.allclose(out2, ref2, atol=1e-6, rtol=1e-6), "odd-shape mismatch"

    # bf16 path (mix computed in bf16, gate sigmoid in f32).
    xb = x.astype(jnp.bfloat16)
    rb = residual.astype(jnp.bfloat16)
    outb = jax.block_until_ready(dynamic_residual_forward(xb, rb, weight))
    refb = dynamic_residual_reference(xb, rb, weight)
    assert jnp.allclose(outb.astype(jnp.float32), refb, atol=2e-2, rtol=2e-2), \
        "bf16 mismatch vs reference"

    print("KERNEL_OK")
</pallas_src>

<mosaic_0001>
module attributes {stable_mosaic.version = 11 : i64} {
  func.func @dynamic_residual_kernel(%arg0: i32, %arg1: memref<8x128xf32, #tpu.memory_space<vmem>>, %arg2: memref<8x128xf32, #tpu.memory_space<vmem>>, %arg3: memref<1x128xf32, #tpu.memory_space<vmem>>, %arg4: memref<8x128xf32, #tpu.memory_space<vmem>>) attributes {dimension_semantics = [#tpu.dimension_semantics<parallel>], iteration_bounds = array<i64: 1>, scalar_prefetch = 0 : i64, scratch_operands = 0 : i64, tpu.core_type = #tpu.core_type<tc>, window_params = [{transform_indices = @transform_0, window_bounds = array<i64: 8, 128>}, {transform_indices = @transform_1, window_bounds = array<i64: 8, 128>}, {pipeline_mode = #tpu.pipeline_mode<synchronous>, transform_indices = @transform_2, window_bounds = array<i64: 1, 128>}, {transform_indices = @transform_3, window_bounds = array<i64: 8, 128>}]} {
    %c0 = arith.constant 0 : index
    %c0_0 = arith.constant 0 : index
    %0 = vector.load %arg3[%c0, %c0_0] : memref<1x128xf32, #tpu.memory_space<vmem>>, vector<1x128xf32>
    %cst = arith.constant 0.000000e+00 : f32
    %1 = vector.broadcast %cst : f32 to vector<1x128xf32>
    %2 = arith.subf %1, %0 : vector<1x128xf32>
    %3 = math.exp %2 : vector<1x128xf32>
    %cst_1 = arith.constant 1.000000e+00 : f32
    %4 = vector.broadcast %cst_1 : f32 to vector<1x128xf32>
    %5 = arith.addf %4, %3 : vector<1x128xf32>
    %cst_2 = arith.constant 1.000000e+00 : f32
    %6 = vector.broadcast %cst_2 : f32 to vector<1x128xf32>
    %7 = arith.divf %6, %5 : vector<1x128xf32>
    %c0_3 = arith.constant 0 : index
    %c0_4 = arith.constant 0 : index
    %8 = vector.load %arg1[%c0_3, %c0_4] : memref<8x128xf32, #tpu.memory_space<vmem>>, vector<8x128xf32>
    %c0_5 = arith.constant 0 : index
    %c0_6 = arith.constant 0 : index
    %9 = vector.load %arg2[%c0_5, %c0_6] : memref<8x128xf32, #tpu.memory_space<vmem>>, vector<8x128xf32>
    %10 = vector.broadcast %7 : vector<1x128xf32> to vector<8x128xf32>
    %11 = arith.mulf %10, %8 : vector<8x128xf32>
    %cst_7 = arith.constant 1.000000e+00 : f32
    %12 = vector.broadcast %cst_7 : f32 to vector<1x128xf32>
    %13 = arith.subf %12, %7 : vector<1x128xf32>
    %14 = vector.broadcast %13 : vector<1x128xf32> to vector<8x128xf32>
    %15 = arith.mulf %14, %9 : vector<8x128xf32>
    %16 = arith.addf %11, %15 : vector<8x128xf32>
    %c0_8 = arith.constant 0 : index
    %c0_9 = arith.constant 0 : index
    %17 = vector.load %arg4[%c0_8, %c0_9] : memref<8x128xf32, #tpu.memory_space<vmem>>, vector<8x128xf32>
    tpu.vector_store %arg4[%c0_8, %c0_9], %16 {strides = array<i32>} : memref<8x128xf32, #tpu.memory_space<vmem>>, vector<8x128xf32>,
    return
  }
  func.func @transform_0(%arg0: i32) -> (i32, i32) {
    %c0_i32 = arith.constant 0 : i32
    %c0_i32_0 = arith.constant 0 : i32
    return %arg0, %c0_i32 : i32, i32
  }
  func.func @transform_1(%arg0: i32) -> (i32, i32) {
    %c0_i32 = arith.constant 0 : i32
    %c0_i32_0 = arith.constant 0 : i32
    return %arg0, %c0_i32 : i32, i32
  }
  func.func @transform_2(%arg0: i32) -> (i32, i32) {
    %c0_i32 = arith.constant 0 : i32
    %c0_i32_0 = arith.constant 0 : i32
    %c0_i32_1 = arith.constant 0 : i32
    return %c0_i32, %c0_i32_0 : i32, i32
  }
  func.func @transform_3(%arg0: i32) -> (i32, i32) {
    %c0_i32 = arith.constant 0 : i32
    %c0_i32_0 = arith.constant 0 : i32
    return %arg0, %c0_i32 : i32, i32
  }
}

</mosaic_0001>

<llo_original>
// kernel: tpu_custom_call.1
$region0: #{tpu_custom_call.1}
  #allocation0 [shape = 'u32[]', space=smem, size = 0x4, offset = 0x4, fixed_abs, tag = 'smem constant byte address 0x4 - core index']
  #allocation1 [shape = 'u32[144,128]{1,0:T(1,128)}', space=vmem, size = 0x12000, scoped, tag = 'internal scratch']
  %s0 = inlined_call_operand.hbm [shape: f32[8,128], index: 0, kind: input, shape index: {}]
  %s1 = inlined_call_operand.hbm [shape: f32[8,128], index: 1, kind: input, shape index: {}]
  %s2 = inlined_call_operand.vmem [shape: f32[1,128], index: 2, kind: input, shape index: {}]
  %s3 = inlined_call_operand.hbm [shape: f32[8,128], index: 3, kind: output, shape index: {}]
  %s4 = sld [smem:[#allocation0]]
  $region30: #{tpu_custom_call.1} parent=0
    _
  %s6 = ssub.s32 1, %s4
  %s7 = scalar_select 0, %s6, %s4
  $region1: #{tpu_custom_call.1} parent=0
    #allocation2 [shape = 'u8[4096]{0}', space=vmem, size = 0x1000, scoped, tag = 'input window, operand 0, single buffered']
    #allocation3 [shape = 's32[1]{0}', space=sflag, size = 0x4, scoped, tag = 'scoped memory for tpu_custom_call.1']
    #allocation4 [shape = 's32[1]{0}', space=sflag, size = 0x4, scoped, tag = 'scoped memory for tpu_custom_call.1']
    #allocation5 [shape = 'u8[4096]{0}', space=vmem, size = 0x1000, scoped, tag = 'input window, operand 1, single buffered']
    #allocation6 [shape = 's32[1]{0}', space=sflag, size = 0x4, scoped, tag = 'scoped memory for tpu_custom_call.1']
    #allocation7 [shape = 'u8[4096]{0}', space=vmem, size = 0x1000, scoped, tag = 'output window, operand 0, single buffered']
    %8 = vsyncpa [#allocation3], 0
    %9 = vsyncpa [#allocation6], 0
    %10 = vsyncpa [#allocation4], 0
    // Predicated region
    $region2: #{tpu_custom_call.1} parent=1 // pred_check
      _
    $region3: #{tpu_custom_call.1} parent=1 // pred_check_branch
      %12 = sbr.rel (0) target = $region5
    $region4: #{tpu_custom_call.1} parent=1 // pred_region
      %s14 = ssub.s32 128, 128
      %15 = vsyncadd [#allocation3], %s14
      %s17 = sshll.u32 [#allocation2], 4
      %s18 = int_to_ptr.vmem [resolvable:$true] %s17
      %20 = dma.hbm_to_vmem [thread:$0]  %s0, 128, %s18, [#allocation3]
    $region5: #{tpu_custom_call.1} parent=1 // pred_fallthru
      _
    // Predicated region
    $region6: #{tpu_custom_call.1} parent=1 // pred_check
      _
    $region7: #{tpu_custom_call.1} parent=1 // pred_check_branch
      %22 = sbr.rel (0) target = $region9
    $region8: #{tpu_custom_call.1} parent=1 // pred_region
      %s24 = ssub.s32 128, 128
      %25 = vsyncadd [#allocation6], %s24
      %s27 = sshll.u32 [#allocation5], 4
      %s28 = int_to_ptr.vmem [resolvable:$true] %s27
      %30 = dma.hbm_to_vmem [thread:$0]  %s1, 128, %s28, [#allocation6]
    $region9: #{tpu_custom_call.1} parent=1 // pred_fallthru
      _
    // Predicated region
    $region10: #{tpu_custom_call.1} parent=1 // pred_check
      _
    $region11: #{tpu_custom_call.1} parent=1 // pred_check_branch
      %32 = sbr.rel (0) target = $region13
    $region12: #{tpu_custom_call.1} parent=1 // pred_region
      _
    $region13: #{tpu_custom_call.1} parent=1 // pred_fallthru
      _
    // Predicated region
    $region14: #{tpu_custom_call.1} parent=1 // pred_check
      _
    $region15: #{tpu_custom_call.1} parent=1 // pred_check_branch
      %34 = sbr.rel (0) target = $region17
    $region16: #{tpu_custom_call.1} parent=1 // pred_region
      %35 = dma.done [#allocation3], 128
    $region17: #{tpu_custom_call.1} parent=1 // pred_fallthru
      _
    // Predicated region
    $region18: #{tpu_custom_call.1} parent=1 // pred_check
      _
    $region19: #{tpu_custom_call.1} parent=1 // pred_check_branch
      %37 = sbr.rel (0) target = $region21
    $region20: #{tpu_custom_call.1} parent=1 // pred_region
      %38 = dma.done [#allocation6], 128
    $region21: #{tpu_custom_call.1} parent=1 // pred_fallthru
      _
    %v39 = vld [vmem:[%s2] sm:$0x1]
    %v40 = vsub.f32 0.0, %v39
    %v41 = vmul.f32 %v40, 1.442695
    %v42 = vpow.pop %v41
    %v43 = vadd.f32 %v42, 1.0
    %v44 = vrcp.pop %v43
    %v45 = vmul.f32 1.0, %v44
    %v46 = vld [vmem:[#allocation2] sm:$0xff]
    %v47 = vld [vmem:[#allocation5] sm:$0xff]
    %v49 = vlaneseq
    %v50 = vshrl.u32 %v49, 7
    %v51 = vsub.s32 0, %v50
    %v52 = vrot.slane %v45, %v51
    %v54 = vmul.f32 %v52, %v46
    %v55 = vsub.f32 1.0, %v45
    %v57 = vlaneseq
    %v58 = vshrl.u32 %v57, 7
    %v59 = vsub.s32 0, %v58
    %v60 = vrot.slane %v55, %v59
    %v62 = vmul.f32 %v60, %v47
    %v63 = vadd.f32 %v54, %v62
    %64 = vst [vmem:[#allocation7] sm:$0xff] %v63
    // Predicated region
    $region22: #{tpu_custom_call.1} parent=1 // pred_check
      _
    $region23: #{tpu_custom_call.1} parent=1 // pred_check_branch
      %66 = sbr.rel (0) target = $region25
    $region24: #{tpu_custom_call.1} parent=1 // pred_region
      %s68 = ssub.s32 128, 128
      %69 = vsyncadd [#allocation4], %s68
      %s71 = sshll.u32 [#allocation7], 4
      %s72 = int_to_ptr.vmem [resolvable:$true] %s71
      %74 = dma.vmem_to_hbm [thread:$0]  %s72, 128, %s3, [#allocation4]
    $region25: #{tpu_custom_call.1} parent=1 // pred_fallthru
      _
    // Predicated region
    $region26: #{tpu_custom_call.1} parent=1 // pred_check
      _
    $region27: #{tpu_custom_call.1} parent=1 // pred_check_branch
      %76 = sbr.rel (0) target = $region29
    $region28: #{tpu_custom_call.1} parent=1 // pred_region
      %77 = dma.done [#allocation4], 128
    $region29: #{tpu_custom_call.1} parent=1 // pred_fallthru
      _
    %78 = vsyncpa [#allocation3], 1
    %79 = vsyncpa [#allocation6], 1
    %80 = vsyncpa [#allocation4], 1

</llo_original>
